<compile_context>
chip_gen: v5e
topology: v5e:2x2
jax: 0.10.0
libtpu: 0.0.40
codegen_flags: <defaults>
</compile_context>

<pallas_src>
import jax
import jax.numpy as jnp
from jax.experimental import pallas as pl
from jax.experimental.pallas import tpu as pltpu


def _mlp_kernel(s_ref, p_ref,
                w1s_ref, w1p_ref, b1_ref,
                w2_ref, b2_ref,
                w3_ref, b3_ref,
                w4_ref, b4_ref,
                w5_ref, b5_ref,
                q_ref):
    """Fused 5-layer MLP: bf16 operands, f32 accumulation, ReLU on layers 1-4."""
    # Layer 1 (concat-free): cat(state, pref) @ W1 == state@W1[:S] + pref@W1[S:]
    h = (jnp.dot(s_ref[...], w1s_ref[...], preferred_element_type=jnp.float32)
         + jnp.dot(p_ref[...], w1p_ref[...], preferred_element_type=jnp.float32)
         + b1_ref[...])
    h = jnp.maximum(h, 0.0).astype(jnp.bfloat16)
    h = jnp.maximum(
        jnp.dot(h, w2_ref[...], preferred_element_type=jnp.float32) + b2_ref[...], 0.0
    ).astype(jnp.bfloat16)
    h = jnp.maximum(
        jnp.dot(h, w3_ref[...], preferred_element_type=jnp.float32) + b3_ref[...], 0.0
    ).astype(jnp.bfloat16)
    h = jnp.maximum(
        jnp.dot(h, w4_ref[...], preferred_element_type=jnp.float32) + b4_ref[...], 0.0
    ).astype(jnp.bfloat16)
    q_ref[...] = (
        jnp.dot(h, w5_ref[...], preferred_element_type=jnp.float32) + b5_ref[...]
    ).astype(q_ref.dtype)


def envelope_linear_cqn_forward(state, preference, params, action_size, reward_size,
                                tile_b=256):
    """Pallas-backed forward of EnvelopeLinearCQN_default. Returns q of shape (B, A, R)."""
    B, S = state.shape
    R = preference.shape[1]
    out_dim = action_size * reward_size
    out_pad = pl.cdiv(out_dim, 128) * 128          # lane-dense final store (>=128)

    (w1, b1), (w2, b2), (w3, b3), (w4, b4), (w5, b5) = params

    # Split W1 so no (B, S+R) concat array is materialized in HBM.
    w1s, w1p = w1[:S, :], w1[S:, :]
    # Zero-pad final layer out-dim to a 128 multiple -> unmasked vst stores.
    w5p = jnp.zeros((w5.shape[0], out_pad), w5.dtype).at[:, :out_dim].set(w5)
    b5p = jnp.zeros((1, out_pad), b5.dtype).at[:, :out_dim].set(b5)

    bf16 = lambda a: a.astype(jnp.bfloat16)
    weights = [bf16(w1s), bf16(w1p), b1.astype(jnp.float32),
               bf16(w2), b2.astype(jnp.float32),
               bf16(w3), b3.astype(jnp.float32),
               bf16(w4), b4.astype(jnp.float32),
               bf16(w5p), b5p.astype(jnp.float32)]

    # Batch tiling: tile must be a multiple of 8 (sublane); pad B if needed.
    tile_b = int(min(tile_b, max(8, B)))
    tile_b = max(8, (tile_b // 8) * 8)
    b_pad = pl.cdiv(B, tile_b) * tile_b
    if b_pad != B:
        state = jnp.pad(state, ((0, b_pad - B), (0, 0)))
        preference = jnp.pad(preference, ((0, b_pad - B), (0, 0)))
    grid = (b_pad // tile_b,)

    s_bf = bf16(state)
    p_bf = bf16(preference)

    batch_spec = lambda feat: pl.BlockSpec((tile_b, feat), lambda i: (i, 0))
    # Constant index_map -> weights/biases DMA'd once, stay VMEM-resident.
    resident = lambda a: pl.BlockSpec(a.shape, lambda i: (0, 0))

    in_specs = [batch_spec(S), batch_spec(R)] + [resident(a) for a in weights]
    out_specs = pl.BlockSpec((tile_b, out_pad), lambda i: (i, 0))

    d1, d2, d3, d4 = w2.shape[0], w3.shape[0], w4.shape[0], w5.shape[0]
    flops = 2 * b_pad * (S * d1 + R * d1 + d1 * d2 + d2 * d3 + d3 * d4 + d4 * out_pad)
    bytes_accessed = (int(s_bf.size) * 2 + int(p_bf.size) * 2
                      + sum(int(a.size) * a.dtype.itemsize for a in weights)
                      + b_pad * out_pad * 4)
    cost = pl.CostEstimate(flops=flops, transcendentals=0,
                           bytes_accessed=bytes_accessed)

    q_pad = pl.pallas_call(
        _mlp_kernel,
        out_shape=jax.ShapeDtypeStruct((b_pad, out_pad), jnp.float32),
        grid=grid,
        in_specs=in_specs,
        out_specs=out_specs,
        compiler_params=pltpu.CompilerParams(
            dimension_semantics=("parallel",),       # v7x: shard batch over 2 TCs
            vmem_limit_bytes=32 * 1024 * 1024),      # explicit budget, v7x-safe
        cost_estimate=cost,
    )(s_bf, p_bf, *weights)

    # TODO(synk): H_() (greedy scalarized-Q selection) is computed on q.detach()
    # in the PyTorch forward but its result is discarded; omitted from the kernel.
    return q_pad[:B, :out_dim].reshape(B, action_size, reward_size)


def _reference_forward(state, preference, params, action_size, reward_size):
    x = jnp.concatenate([state, preference], axis=1).astype(jnp.float32)
    for i, (w, b) in enumerate(params):
        x = x @ w + b
        if i < len(params) - 1:
            x = jnp.maximum(x, 0.0)
    return x.reshape(x.shape[0], action_size, reward_size)


def _init_params(key, state_size, reward_size, action_size):
    """Deterministic synthetic parameters matching the nn.Linear shapes."""
    d0 = state_size + reward_size
    dims = [d0, d0 * 16, d0 * 32, d0 * 64, d0 * 32, action_size * reward_size]
    params = []
    for i in range(5):
        key, kw, kb = jax.random.split(key, 3)
        fan_in = dims[i]
        bound = 1.0 / float(jnp.sqrt(jnp.float32(fan_in)))
        # stored as (in, out) = PyTorch weight transposed
        w = jax.random.uniform(kw, (dims[i], dims[i + 1]), jnp.float32, -bound, bound)
        b = jax.random.uniform(kb, (1, dims[i + 1]), jnp.float32, -bound, bound)
        params.append((w, b))
    return params


if __name__ == "__main__":
    # Small shapes consistent with the module:
    #   state_size=6, reward_size=2 -> S+R=8; hidden dims 128/256/512/256
    #   action_size=4 -> q has shape (B, 4, 2)
    B, state_size, reward_size, action_size = 8, 6, 2, 4

    key = jax.random.PRNGKey(0)
    k_state, k_pref, k_params = jax.random.split(key, 3)
    state = jax.random.normal(k_state, (B, state_size), jnp.float32)
    preference = jax.random.normal(k_pref, (B, reward_size), jnp.float32)
    params = _init_params(k_params, state_size, reward_size, action_size)

    q = envelope_linear_cqn_forward(state, preference, params, action_size, reward_size)
    q = jax.block_until_ready(q)

    q_ref = _reference_forward(state, preference, params, action_size, reward_size)
    assert q.shape == (B, action_size, reward_size)
    # bf16 operands / f32 accumulation -> relaxed tolerance vs the f32 reference.
    assert jnp.allclose(q, q_ref, atol=1e-2, rtol=1e-2), "Pallas output mismatch vs reference"

    print("KERNEL_OK")
</pallas_src>

<mosaic_0001>
module attributes {stable_mosaic.version = 11 : i64} {
  func.func @_mlp_kernel(%arg0: i32, %arg1: memref<8x6xbf16, #tpu.memory_space<vmem>>, %arg2: memref<8x2xbf16, #tpu.memory_space<vmem>>, %arg3: memref<6x128xbf16, #tpu.memory_space<vmem>>, %arg4: memref<2x128xbf16, #tpu.memory_space<vmem>>, %arg5: memref<1x128xf32, #tpu.memory_space<vmem>>, %arg6: memref<128x256xbf16, #tpu.memory_space<vmem>>, %arg7: memref<1x256xf32, #tpu.memory_space<vmem>>, %arg8: memref<256x512xbf16, #tpu.memory_space<vmem>>, %arg9: memref<1x512xf32, #tpu.memory_space<vmem>>, %arg10: memref<512x256xbf16, #tpu.memory_space<vmem>>, %arg11: memref<1x256xf32, #tpu.memory_space<vmem>>, %arg12: memref<256x128xbf16, #tpu.memory_space<vmem>>, %arg13: memref<1x128xf32, #tpu.memory_space<vmem>>, %arg14: memref<8x128xf32, #tpu.memory_space<vmem>>) attributes {dimension_semantics = [#tpu.dimension_semantics<parallel>], iteration_bounds = array<i64: 1>, scalar_prefetch = 0 : i64, scratch_operands = 0 : i64, tpu.core_type = #tpu.core_type<tc>, window_params = [{transform_indices = @transform_0, window_bounds = array<i64: 8, 6>}, {transform_indices = @transform_1, window_bounds = array<i64: 8, 2>}, {pipeline_mode = #tpu.pipeline_mode<synchronous>, transform_indices = @transform_2, window_bounds = array<i64: 6, 128>}, {pipeline_mode = #tpu.pipeline_mode<synchronous>, transform_indices = @transform_3, window_bounds = array<i64: 2, 128>}, {pipeline_mode = #tpu.pipeline_mode<synchronous>, transform_indices = @transform_4, window_bounds = array<i64: 1, 128>}, {pipeline_mode = #tpu.pipeline_mode<synchronous>, transform_indices = @transform_5, window_bounds = array<i64: 128, 256>}, {pipeline_mode = #tpu.pipeline_mode<synchronous>, transform_indices = @transform_6, window_bounds = array<i64: 1, 256>}, {pipeline_mode = #tpu.pipeline_mode<synchronous>, transform_indices = @transform_7, window_bounds = array<i64: 256, 512>}, {pipeline_mode = #tpu.pipeline_mode<synchronous>, transform_indices = @transform_8, window_bounds = array<i64: 1, 512>}, {pipeline_mode = #tpu.pipeline_mode<synchronous>, transform_indices = @transform_9, window_bounds = array<i64: 512, 256>}, {pipeline_mode = #tpu.pipeline_mode<synchronous>, transform_indices = @transform_10, window_bounds = array<i64: 1, 256>}, {pipeline_mode = #tpu.pipeline_mode<synchronous>, transform_indices = @transform_11, window_bounds = array<i64: 256, 128>}, {pipeline_mode = #tpu.pipeline_mode<synchronous>, transform_indices = @transform_12, window_bounds = array<i64: 1, 128>}, {transform_indices = @transform_13, window_bounds = array<i64: 8, 128>}]} {
    %c0 = arith.constant 0 : index
    %c0_0 = arith.constant 0 : index
    %0 = vector.load %arg1[%c0, %c0_0] : memref<8x6xbf16, #tpu.memory_space<vmem>>, vector<8x6xbf16>
    %c0_1 = arith.constant 0 : index
    %c0_2 = arith.constant 0 : index
    %1 = vector.load %arg3[%c0_1, %c0_2] : memref<6x128xbf16, #tpu.memory_space<vmem>>, vector<6x128xbf16>
    %cst = arith.constant dense<0.000000e+00> : vector<8x128xf32>
    %2 = tpu.matmul %0, %1, %cst {dimension_numbers = #tpu.dot_dimension_numbers<[1], [0], [0], [1], [0, 0, 1, 1], [], []>} : vector<8x6xbf16>, vector<6x128xbf16>, vector<8x128xf32> -> vector<8x128xf32>
    %c0_3 = arith.constant 0 : index
    %c0_4 = arith.constant 0 : index
    %3 = vector.load %arg2[%c0_3, %c0_4] : memref<8x2xbf16, #tpu.memory_space<vmem>>, vector<8x2xbf16>
    %c0_5 = arith.constant 0 : index
    %c0_6 = arith.constant 0 : index
    %4 = vector.load %arg4[%c0_5, %c0_6] : memref<2x128xbf16, #tpu.memory_space<vmem>>, vector<2x128xbf16>
    %cst_7 = arith.constant dense<0.000000e+00> : vector<8x128xf32>
    %5 = tpu.matmul %3, %4, %cst_7 {dimension_numbers = #tpu.dot_dimension_numbers<[1], [0], [0], [1], [0, 0, 1, 1], [], []>} : vector<8x2xbf16>, vector<2x128xbf16>, vector<8x128xf32> -> vector<8x128xf32>
    %6 = arith.addf %2, %5 : vector<8x128xf32>
    %c0_8 = arith.constant 0 : index
    %c0_9 = arith.constant 0 : index
    %7 = vector.load %arg5[%c0_8, %c0_9] : memref<1x128xf32, #tpu.memory_space<vmem>>, vector<1x128xf32>
    %8 = vector.broadcast %7 : vector<1x128xf32> to vector<8x128xf32>
    %9 = arith.addf %6, %8 : vector<8x128xf32>
    %cst_10 = arith.constant 0.000000e+00 : f32
    %10 = vector.broadcast %cst_10 : f32 to vector<8x128xf32>
    %11 = arith.maximumf %9, %10 : vector<8x128xf32>
    %12 = arith.truncf %11 : vector<8x128xf32> to vector<8x128xbf16>
    %c0_11 = arith.constant 0 : index
    %c0_12 = arith.constant 0 : index
    %13 = vector.load %arg6[%c0_11, %c0_12] : memref<128x256xbf16, #tpu.memory_space<vmem>>, vector<128x256xbf16>
    %cst_13 = arith.constant dense<0.000000e+00> : vector<8x256xf32>
    %14 = tpu.matmul %12, %13, %cst_13 {dimension_numbers = #tpu.dot_dimension_numbers<[1], [0], [0], [1], [0, 0, 1, 1], [], []>} : vector<8x128xbf16>, vector<128x256xbf16>, vector<8x256xf32> -> vector<8x256xf32>
    %c0_14 = arith.constant 0 : index
    %c0_15 = arith.constant 0 : index
    %15 = vector.load %arg7[%c0_14, %c0_15] : memref<1x256xf32, #tpu.memory_space<vmem>>, vector<1x256xf32>
    %16 = vector.broadcast %15 : vector<1x256xf32> to vector<8x256xf32>
    %17 = arith.addf %14, %16 : vector<8x256xf32>
    %cst_16 = arith.constant 0.000000e+00 : f32
    %18 = vector.broadcast %cst_16 : f32 to vector<8x256xf32>
    %19 = arith.maximumf %17, %18 : vector<8x256xf32>
    %20 = arith.truncf %19 : vector<8x256xf32> to vector<8x256xbf16>
    %c0_17 = arith.constant 0 : index
    %c0_18 = arith.constant 0 : index
    %21 = vector.load %arg8[%c0_17, %c0_18] : memref<256x512xbf16, #tpu.memory_space<vmem>>, vector<256x512xbf16>
    %cst_19 = arith.constant dense<0.000000e+00> : vector<8x512xf32>
    %22 = tpu.matmul %20, %21, %cst_19 {dimension_numbers = #tpu.dot_dimension_numbers<[1], [0], [0], [1], [0, 0, 1, 1], [], []>} : vector<8x256xbf16>, vector<256x512xbf16>, vector<8x512xf32> -> vector<8x512xf32>
    %c0_20 = arith.constant 0 : index
    %c0_21 = arith.constant 0 : index
    %23 = vector.load %arg9[%c0_20, %c0_21] : memref<1x512xf32, #tpu.memory_space<vmem>>, vector<1x512xf32>
    %24 = vector.broadcast %23 : vector<1x512xf32> to vector<8x512xf32>
    %25 = arith.addf %22, %24 : vector<8x512xf32>
    %cst_22 = arith.constant 0.000000e+00 : f32
    %26 = vector.broadcast %cst_22 : f32 to vector<8x512xf32>
    %27 = arith.maximumf %25, %26 : vector<8x512xf32>
    %28 = arith.truncf %27 : vector<8x512xf32> to vector<8x512xbf16>
    %c0_23 = arith.constant 0 : index
    %c0_24 = arith.constant 0 : index
    %29 = vector.load %arg10[%c0_23, %c0_24] : memref<512x256xbf16, #tpu.memory_space<vmem>>, vector<512x256xbf16>
    %cst_25 = arith.constant dense<0.000000e+00> : vector<8x256xf32>
    %30 = tpu.matmul %28, %29, %cst_25 {dimension_numbers = #tpu.dot_dimension_numbers<[1], [0], [0], [1], [0, 0, 1, 1], [], []>} : vector<8x512xbf16>, vector<512x256xbf16>, vector<8x256xf32> -> vector<8x256xf32>
    %c0_26 = arith.constant 0 : index
    %c0_27 = arith.constant 0 : index
    %31 = vector.load %arg11[%c0_26, %c0_27] : memref<1x256xf32, #tpu.memory_space<vmem>>, vector<1x256xf32>
    %32 = vector.broadcast %31 : vector<1x256xf32> to vector<8x256xf32>
    %33 = arith.addf %30, %32 : vector<8x256xf32>
    %cst_28 = arith.constant 0.000000e+00 : f32
    %34 = vector.broadcast %cst_28 : f32 to vector<8x256xf32>
    %35 = arith.maximumf %33, %34 : vector<8x256xf32>
    %36 = arith.truncf %35 : vector<8x256xf32> to vector<8x256xbf16>
    %c0_29 = arith.constant 0 : index
    %c0_30 = arith.constant 0 : index
    %37 = vector.load %arg12[%c0_29, %c0_30] : memref<256x128xbf16, #tpu.memory_space<vmem>>, vector<256x128xbf16>
    %cst_31 = arith.constant dense<0.000000e+00> : vector<8x128xf32>
    %38 = tpu.matmul %36, %37, %cst_31 {dimension_numbers = #tpu.dot_dimension_numbers<[1], [0], [0], [1], [0, 0, 1, 1], [], []>} : vector<8x256xbf16>, vector<256x128xbf16>, vector<8x128xf32> -> vector<8x128xf32>
    %c0_32 = arith.constant 0 : index
    %c0_33 = arith.constant 0 : index
    %39 = vector.load %arg13[%c0_32, %c0_33] : memref<1x128xf32, #tpu.memory_space<vmem>>, vector<1x128xf32>
    %40 = vector.broadcast %39 : vector<1x128xf32> to vector<8x128xf32>
    %41 = arith.addf %38, %40 : vector<8x128xf32>
    %c0_34 = arith.constant 0 : index
    %c0_35 = arith.constant 0 : index
    %42 = vector.load %arg14[%c0_34, %c0_35] : memref<8x128xf32, #tpu.memory_space<vmem>>, vector<8x128xf32>
    tpu.vector_store %arg14[%c0_34, %c0_35], %41 {strides = array<i32>} : memref<8x128xf32, #tpu.memory_space<vmem>>, vector<8x128xf32>,
    return
  }
  func.func @transform_0(%arg0: i32) -> (i32, i32) {
    %c0_i32 = arith.constant 0 : i32
    %c0_i32_0 = arith.constant 0 : i32
    return %arg0, %c0_i32 : i32, i32
  }
  func.func @transform_1(%arg0: i32) -> (i32, i32) {
    %c0_i32 = arith.constant 0 : i32
    %c0_i32_0 = arith.constant 0 : i32
    return %arg0, %c0_i32 : i32, i32
  }
  func.func @transform_2(%arg0: i32) -> (i32, i32) {
    %c0_i32 = arith.constant 0 : i32
    %c0_i32_0 = arith.constant 0 : i32
    %c0_i32_1 = arith.constant 0 : i32
    return %c0_i32, %c0_i32_0 : i32, i32
  }
  func.func @transform_3(%arg0: i32) -> (i32, i32) {
    %c0_i32 = arith.constant 0 : i32
    %c0_i32_0 = arith.constant 0 : i32
    %c0_i32_1 = arith.constant 0 : i32
    return %c0_i32, %c0_i32_0 : i32, i32
  }
  func.func @transform_4(%arg0: i32) -> (i32, i32) {
    %c0_i32 = arith.constant 0 : i32
    %c0_i32_0 = arith.constant 0 : i32
    %c0_i32_1 = arith.constant 0 : i32
    return %c0_i32, %c0_i32_0 : i32, i32
  }
  func.func @transform_5(%arg0: i32) -> (i32, i32) {
    %c0_i32 = arith.constant 0 : i32
    %c0_i32_0 = arith.constant 0 : i32
    %c0_i32_1 = arith.constant 0 : i32
    return %c0_i32, %c0_i32_0 : i32, i32
  }
  func.func @transform_6(%arg0: i32) -> (i32, i32) {
    %c0_i32 = arith.constant 0 : i32
    %c0_i32_0 = arith.constant 0 : i32
    %c0_i32_1 = arith.constant 0 : i32
    return %c0_i32, %c0_i32_0 : i32, i32
  }
  func.func @transform_7(%arg0: i32) -> (i32, i32) {
    %c0_i32 = arith.constant 0 : i32
    %c0_i32_0 = arith.constant 0 : i32
    %c0_i32_1 = arith.constant 0 : i32
    return %c0_i32, %c0_i32_0 : i32, i32
  }
  func.func @transform_8(%arg0: i32) -> (i32, i32) {
    %c0_i32 = arith.constant 0 : i32
    %c0_i32_0 = arith.constant 0 : i32
    %c0_i32_1 = arith.constant 0 : i32
    return %c0_i32, %c0_i32_0 : i32, i32
  }
  func.func @transform_9(%arg0: i32) -> (i32, i32) {
    %c0_i32 = arith.constant 0 : i32
    %c0_i32_0 = arith.constant 0 : i32
    %c0_i32_1 = arith.constant 0 : i32
    return %c0_i32, %c0_i32_0 : i32, i32
  }
  func.func @transform_10(%arg0: i32) -> (i32, i32) {
    %c0_i32 = arith.constant 0 : i32
    %c0_i32_0 = arith.constant 0 : i32
    %c0_i32_1 = arith.constant 0 : i32
    return %c0_i32, %c0_i32_0 : i32, i32
  }
  func.func @transform_11(%arg0: i32) -> (i32, i32) {
    %c0_i32 = arith.constant 0 : i32
    %c0_i32_0 = arith.constant 0 : i32
    %c0_i32_1 = arith.constant 0 : i32
    return %c0_i32, %c0_i32_0 : i32, i32
  }
  func.func @transform_12(%arg0: i32) -> (i32, i32) {
    %c0_i32 = arith.constant 0 : i32
    %c0_i32_0 = arith.constant 0 : i32
    %c0_i32_1 = arith.constant 0 : i32
    return %c0_i32, %c0_i32_0 : i32, i32
  }
  func.func @transform_13(%arg0: i32) -> (i32, i32) {
    %c0_i32 = arith.constant 0 : i32
    %c0_i32_0 = arith.constant 0 : i32
    return %arg0, %c0_i32 : i32, i32
  }
}

</mosaic_0001>

<llo_original>
// kernel: tpu_custom_call.1
$region0: #{tpu_custom_call.1}
  #allocation0 [shape = 'u32[]', space=smem, size = 0x4, offset = 0x4, fixed_abs, tag = 'smem constant byte address 0x4 - core index']
  #allocation1 [shape = 'u32[72,128]{1,0:T(1,128)}', space=vmem, size = 0x9000, scoped, tag = 'internal scratch']
  %s0 = inlined_call_operand.vmem [shape: bf16[8,6], index: 0, kind: input, shape index: {}]
  %s1 = inlined_call_operand.vmem [shape: bf16[8,2], index: 1, kind: input, shape index: {}]
  %s2 = inlined_call_operand.hbm [shape: bf16[6,128], index: 2, kind: input, shape index: {}]
  %s3 = inlined_call_operand.hbm [shape: bf16[2,128], index: 3, kind: input, shape index: {}]
  %s4 = inlined_call_operand.hbm [shape: f32[1,128], index: 4, kind: input, shape index: {}]
  %s5 = inlined_call_operand.hbm [shape: bf16[128,256], index: 5, kind: input, shape index: {}]
  %s6 = inlined_call_operand.vmem [shape: f32[1,256], index: 6, kind: input, shape index: {}]
  %s7 = inlined_call_operand.hbm [shape: bf16[256,512], index: 7, kind: input, shape index: {}]
  %s8 = inlined_call_operand.vmem [shape: f32[1,512], index: 8, kind: input, shape index: {}]
  %s9 = inlined_call_operand.hbm [shape: bf16[512,256], index: 9, kind: input, shape index: {}]
  %s10 = inlined_call_operand.vmem [shape: f32[1,256], index: 10, kind: input, shape index: {}]
  %s11 = inlined_call_operand.hbm [shape: bf16[256,128], index: 11, kind: input, shape index: {}]
  %s12 = inlined_call_operand.vmem [shape: f32[1,128], index: 12, kind: input, shape index: {}]
  %s13 = inlined_call_operand.hbm [shape: f32[8,128], index: 13, kind: output, shape index: {}]
  %s14 = sld [smem:[#allocation0]]
  $region90: #{tpu_custom_call.1} parent=0
    _
  %s16 = ssub.s32 1, %s14
  %s17 = scalar_select 0, %s16, %s14
  $region1: #{tpu_custom_call.1} parent=0
    #allocation2 [shape = 'u8[2048]{0}', space=vmem, size = 0x800, scoped, tag = 'input window, operand 2, single buffered']
    #allocation3 [shape = 's32[1]{0}', space=sflag, size = 0x4, scoped, tag = 'scoped memory for tpu_custom_call.1']
    #allocation4 [shape = 's32[1]{0}', space=sflag, size = 0x4, scoped, tag = 'scoped memory for tpu_custom_call.1']
    #allocation5 [shape = 'u8[512]{0}', space=vmem, size = 0x400, scoped, tag = 'input window, operand 3, single buffered']
    #allocation6 [shape = 's32[1]{0}', space=sflag, size = 0x4, scoped, tag = 'scoped memory for tpu_custom_call.1']
    #allocation7 [shape = 'u8[512]{0}', space=vmem, size = 0x400, scoped, tag = 'input window, operand 4, single buffered']
    #allocation8 [shape = 'u8[65536]{0}', space=vmem, size = 0x10000, scoped, tag = 'input window, operand 5, single buffered']
    #allocation9 [shape = 's32[1]{0}', space=sflag, size = 0x4, scoped, tag = 'scoped memory for tpu_custom_call.1']
    #allocation10 [shape = 'u8[262144]{0}', space=vmem, size = 0x40000, scoped, tag = 'input window, operand 7, single buffered']
    #allocation11 [shape = 'u8[262144]{0}', space=vmem, size = 0x40000, scoped, tag = 'input window, operand 9, single buffered']
    #allocation12 [shape = 's32[1]{0}', space=sflag, size = 0x4, scoped, tag = 'scoped memory for tpu_custom_call.1']
    #allocation13 [shape = 'u8[65536]{0}', space=vmem, size = 0x10000, scoped, tag = 'input window, operand 11, single buffered']
    #allocation14 [shape = 'u8[4096]{0}', space=vmem, size = 0x1000, scoped, tag = 'output window, operand 0, single buffered']
    %18 = vsyncpa [#allocation3], 0
    %19 = vsyncpa [#allocation6], 0
    %20 = vsyncpa [#allocation9], 0
    %21 = vsyncpa [#allocation12], 0
    %22 = vsyncpa [#allocation4], 0
    // Predicated region
    $region2: #{tpu_custom_call.1} parent=1 // pred_check
      _
    $region3: #{tpu_custom_call.1} parent=1 // pred_check_branch
      %24 = sbr.rel (0) target = $region5
    $region4: #{tpu_custom_call.1} parent=1 // pred_region
      _
    $region5: #{tpu_custom_call.1} parent=1 // pred_fallthru
      _
    // Predicated region
    $region6: #{tpu_custom_call.1} parent=1 // pred_check
      _
    $region7: #{tpu_custom_call.1} parent=1 // pred_check_branch
      %26 = sbr.rel (0) target = $region9
    $region8: #{tpu_custom_call.1} parent=1 // pred_region
      _
    $region9: #{tpu_custom_call.1} parent=1 // pred_fallthru
      _
    // Predicated region
    $region10: #{tpu_custom_call.1} parent=1 // pred_check
      _
    $region11: #{tpu_custom_call.1} parent=1 // pred_check_branch
      %28 = sbr.rel (0) target = $region13
    $region12: #{tpu_custom_call.1} parent=1 // pred_region
      %30 = vsyncadd [#allocation3], 0
      %s32 = sshll.u32 %s2, 4
      %s33 = int_to_ptr.hbm [resolvable:$true] %s32
      %s34 = sshll.u32 [#allocation2], 4
      %s35 = int_to_ptr.vmem [resolvable:$true] %s34
      %37 = dma.hbm_to_vmem [thread:$0]  %s33, 64, %s35, [#allocation3]
    $region13: #{tpu_custom_call.1} parent=1 // pred_fallthru
      _
    // Predicated region
    $region14: #{tpu_custom_call.1} parent=1 // pred_check
      _
    $region15: #{tpu_custom_call.1} parent=1 // pred_check_branch
      %39 = sbr.rel (0) target = $region17
    $region16: #{tpu_custom_call.1} parent=1 // pred_region
      %41 = vsyncadd [#allocation6], 0
      %s43 = sshll.u32 %s3, 4
      %s44 = int_to_ptr.hbm [resolvable:$true] %s43
      %s45 = sshll.u32 [#allocation5], 4
      %s46 = int_to_ptr.vmem [resolvable:$true] %s45
      %48 = dma.hbm_to_vmem [thread:$0]  %s44, 16, %s46, [#allocation6]
    $region17: #{tpu_custom_call.1} parent=1 // pred_fallthru
      _
    // Predicated region
    $region18: #{tpu_custom_call.1} parent=1 // pred_check
      _
    $region19: #{tpu_custom_call.1} parent=1 // pred_check_branch
      %50 = sbr.rel (0) target = $region21
    $region20: #{tpu_custom_call.1} parent=1 // pred_region
      %52 = vsyncadd [#allocation6], 0
      %s54 = sshll.u32 %s4, 4
      %s55 = int_to_ptr.hbm [resolvable:$true] %s54
      %s56 = sshll.u32 [#allocation7], 4
      %s57 = int_to_ptr.vmem [resolvable:$true] %s56
      %59 = dma.hbm_to_vmem [thread:$0]  %s55, 16, %s57, [#allocation6]
    $region21: #{tpu_custom_call.1} parent=1 // pred_fallthru
      _
    // Predicated region
    $region22: #{tpu_custom_call.1} parent=1 // pred_check
      _
    $region23: #{tpu_custom_call.1} parent=1 // pred_check_branch
      %61 = sbr.rel (0) target = $region25
    $region24: #{tpu_custom_call.1} parent=1 // pred_region
      %63 = vsyncadd [#allocation9], 0
      %s64 = sshll.u32 %s5, 4
      %s65 = int_to_ptr.hbm [resolvable:$true] %s64
      %s66 = sshll.u32 [#allocation8], 4
      %s67 = int_to_ptr.vmem [resolvable:$true] %s66
      %72 = dma.hbm_to_vmem [thread:$0]  %s65, 2048, %s67, [#allocation9], 128, 128, 8
    $region25: #{tpu_custom_call.1} parent=1 // pred_fallthru
      _
    // Predicated region
    $region26: #{tpu_custom_call.1} parent=1 // pred_check
      _
    $region27: #{tpu_custom_call.1} parent=1 // pred_check_branch
      %74 = sbr.rel (0) target = $region29
    $region28: #{tpu_custom_call.1} parent=1 // pred_region
      _
    $region29: #{tpu_custom_call.1} parent=1 // pred_fallthru
      _
    // Predicated region
    $region30: #{tpu_custom_call.1} parent=1 // pred_check
      _
    $region31: #{tpu_custom_call.1} parent=1 // pred_check_branch
      %76 = sbr.rel (0) target = $region33
    $region32: #{tpu_custom_call.1} parent=1 // pred_region
      %78 = vsyncadd [#allocation9], 0
      %s79 = sshll.u32 %s7, 4
      %s80 = int_to_ptr.hbm [resolvable:$true] %s79
      %s81 = sshll.u32 [#allocation10], 4
      %s82 = int_to_ptr.vmem [resolvable:$true] %s81
      %87 = dma.hbm_to_vmem [thread:$0]  %s80, 8192, %s82, [#allocation9], 256, 256, 16
    $region33: #{tpu_custom_call.1} parent=1 // pred_fallthru
      _
    // Predicated region
    $region34: #{tpu_custom_call.1} parent=1 // pred_check
      _
    $region35: #{tpu_custom_call.1} parent=1 // pred_check_branch
      %89 = sbr.rel (0) target = $region37
    $region36: #{tpu_custom_call.1} parent=1 // pred_region
      _
    $region37: #{tpu_custom_call.1} parent=1 // pred_fallthru
      _
    // Predicated region
    $region38: #{tpu_custom_call.1} parent=1 // pred_check
      _
    $region39: #{tpu_custom_call.1} parent=1 // pred_check_branch
      %91 = sbr.rel (0) target = $region41
    $region40: #{tpu_custom_call.1} parent=1 // pred_region
      %93 = vsyncadd [#allocation12], 0
      %s94 = sshll.u32 %s9, 4
      %s95 = int_to_ptr.hbm [resolvable:$true] %s94
      %s96 = sshll.u32 [#allocation11], 4
      %s97 = int_to_ptr.vmem [resolvable:$true] %s96
      %102 = dma.hbm_to_vmem [thread:$0]  %s95, 8192, %s97, [#allocation12], 128, 128, 8
    $region41: #{tpu_custom_call.1} parent=1 // pred_fallthru
      _
    // Predicated region
    $region42: #{tpu_custom_call.1} parent=1 // pred_check
      _
    $region43: #{tpu_custom_call.1} parent=1 // pred_check_branch
      %104 = sbr.rel (0) target = $region45
    $region44: #{tpu_custom_call.1} parent=1 // pred_region
      _
    $region45: #{tpu_custom_call.1} parent=1 // pred_fallthru
      _
    // Predicated region
    $region46: #{tpu_custom_call.1} parent=1 // pred_check
      _
    $region47: #{tpu_custom_call.1} parent=1 // pred_check_branch
      %106 = sbr.rel (0) target = $region49
    $region48: #{tpu_custom_call.1} parent=1 // pred_region
      %108 = vsyncadd [#allocation12], 0
      %s109 = sshll.u32 %s11, 4
      %s110 = int_to_ptr.hbm [resolvable:$true] %s109
      %s111 = sshll.u32 [#allocation13], 4
      %s112 = int_to_ptr.vmem [resolvable:$true] %s111
      %117 = dma.hbm_to_vmem [thread:$0]  %s110, 2048, %s112, [#allocation12], 64, 64, 4
    $region49: #{tpu_custom_call.1} parent=1 // pred_fallthru
      _
    // Predicated region
    $region50: #{tpu_custom_call.1} parent=1 // pred_check
      _
    $region51: #{tpu_custom_call.1} parent=1 // pred_check_branch
      %119 = sbr.rel (0) target = $region53
    $region52: #{tpu_custom_call.1} parent=1 // pred_region
      _
    $region53: #{tpu_custom_call.1} parent=1 // pred_fallthru
      _
    // Predicated region
    $region54: #{tpu_custom_call.1} parent=1 // pred_check
      _
    $region55: #{tpu_custom_call.1} parent=1 // pred_check_branch
      %121 = sbr.rel (0) target = $region57
    $region56: #{tpu_custom_call.1} parent=1 // pred_region
      %123 = dma.done [#allocation3], 64
    $region57: #{tpu_custom_call.1} parent=1 // pred_fallthru
      _
    // Predicated region
    $region58: #{tpu_custom_call.1} parent=1 // pred_check
      _
    $region59: #{tpu_custom_call.1} parent=1 // pred_check_branch
      %125 = sbr.rel (0) target = $region61
    $region60: #{tpu_custom_call.1} parent=1 // pred_region
      %127 = dma.done [#allocation6], 16
    $region61: #{tpu_custom_call.1} parent=1 // pred_fallthru
      _
    // Predicated region
    $region62: #{tpu_custom_call.1} parent=1 // pred_check
      _
    $region63: #{tpu_custom_call.1} parent=1 // pred_check_branch
      %129 = sbr.rel (0) target = $region65
    $region64: #{tpu_custom_call.1} parent=1 // pred_region
      %131 = dma.done [#allocation6], 16
    $region65: #{tpu_custom_call.1} parent=1 // pred_fallthru
      _
    // Predicated region
    $region66: #{tpu_custom_call.1} parent=1 // pred_check
      _
    $region67: #{tpu_custom_call.1} parent=1 // pred_check_branch
      %133 = sbr.rel (0) target = $region69
    $region68: #{tpu_custom_call.1} parent=1 // pred_region
      %135 = dma.done [#allocation9], 2048
    $region69: #{tpu_custom_call.1} parent=1 // pred_fallthru
      _
    // Predicated region
    $region70: #{tpu_custom_call.1} parent=1 // pred_check
      _
    $region71: #{tpu_custom_call.1} parent=1 // pred_check_branch
      %137 = sbr.rel (0) target = $region73
    $region72: #{tpu_custom_call.1} parent=1 // pred_region
      %139 = dma.done [#allocation9], 8192
    $region73: #{tpu_custom_call.1} parent=1 // pred_fallthru
      _
    // Predicated region
    $region74: #{tpu_custom_call.1} parent=1 // pred_check
      _
    $region75: #{tpu_custom_call.1} parent=1 // pred_check_branch
      %141 = sbr.rel (0) target = $region77
    $region76: #{tpu_custom_call.1} parent=1 // pred_region
      %143 = dma.done [#allocation12], 8192
    $region77: #{tpu_custom_call.1} parent=1 // pred_fallthru
      _
    // Predicated region
    $region78: #{tpu_custom_call.1} parent=1 // pred_check
      _
    $region79: #{tpu_custom_call.1} parent=1 // pred_check_branch
      %145 = sbr.rel (0) target = $region81
    $region80: #{tpu_custom_call.1} parent=1 // pred_region
      %147 = dma.done [#allocation12], 2048
    $region81: #{tpu_custom_call.1} parent=1 // pred_fallthru
      _
    %v149 = vld [vmem:[%s0] sm:$0xf]
    %v150 = vld [vmem:[#allocation2] sm:$0x7]
    %v151 = vld [vmem:[%s1] sm:$0xf]
    %v152 = vld [vmem:[#allocation5] sm:$0x1]
    %vm153 = vcmask 15360
    %v155 = vsel %vm153, %v151, 0
    %vm157 = vcmask 1040384
    %v159 = vsel %vm157, %v152, 0
    %161 = vmatpush.bf16.msra.mxu0 0
    %162 = vmatpush.bf16.msra.mxu0 0
    %163 = vmatpush.bf16.msra.mxu0 0
    %164 = vmatpush.bf16.msra.mxu0 0
    %165 = vmatpush.bf16.msra.mxu0 0
    %166 = vmatpush.bf16.msra.mxu0 0
    %167 = vmatpush.bf16.msra.mxu0 0
    %168 = vmatpush.bf16.msra.mxu0 %v159
    %169 = vmatmul.bf16.gmra.mxu0 %v155
    %v170 = vpop.f32.mrf.mxu0
    %v171 = vadd.f32 0.0, %v170
    %v172 = vpop.f32.mrf.mxu0
    %173 = vdwg.mxu0
    %vm174 = vcmask 48128
    %v176 = vsel %vm174, %v149, 0
    %vm178 = vcmask 1042432
    %v180 = vsel %vm178, %v150, 0
    %182 = vmatpush.bf16.msra.mxu0 0
    %183 = vmatpush.bf16.msra.mxu0 0
    %184 = vmatpush.bf16.msra.mxu0 0
    %185 = vmatpush.bf16.msra.mxu0 0
    %186 = vmatpush.bf16.msra.mxu0 0
    %187 = vmatpush.bf16.msra.mxu0 0
    %188 = vmatpush.bf16.msra.mxu0 0
    %189 = vmatpush.bf16.msra.mxu0 %v180
    %190 = vmatmul.bf16.gmra.mxu0 %v176
    %v191 = vpop.f32.mrf.mxu0
    %v192 = vadd.f32 %v171, %v191
    %v193 = vpop.f32.mrf.mxu0
    %194 = vdwg.mxu0
    %v195 = vld [vmem:[#allocation7] sm:$0x1]
    %v197 = vperm.slane %v195, 0
    %v199 = vadd.f32 %v192, %v197
    %v200 = vmax.f32 %v199, 0.0
    %v201 = vpack.c.bf16 %v200, %v200
    %v202 = vld [vmem:[#allocation8] sm:$0xff]
    %v203 = vld [vmem:[#allocation8 + $0x8] sm:$0xff]
    %v204 = vld [vmem:[#allocation8 + $0x10] sm:$0xff]
    %v205 = vld [vmem:[#allocation8 + $0x18] sm:$0xff]
    %v206 = vld [vmem:[#allocation8 + $0x20] sm:$0xff]
    %v207 = vld [vmem:[#allocation8 + $0x28] sm:$0xff]
    %v208 = vld [vmem:[#allocation8 + $0x30] sm:$0xff]
    %v209 = vld [vmem:[#allocation8 + $0x38] sm:$0xff]
    %v210 = vld [vmem:[#allocation8 + $0x40] sm:$0xff]
    %v211 = vld [vmem:[#allocation8 + $0x48] sm:$0xff]
    %v212 = vld [vmem:[#allocation8 + $0x50] sm:$0xff]
    %v213 = vld [vmem:[#allocation8 + $0x58] sm:$0xff]
    %v214 = vld [vmem:[#allocation8 + $0x60] sm:$0xff]
    %v215 = vld [vmem:[#allocation8 + $0x68] sm:$0xff]
    %v216 = vld [vmem:[#allocation8 + $0x70] sm:$0xff]
    %v217 = vld [vmem:[#allocation8 + $0x78] sm:$0xff]
    %v218 = vld [vmem:[%s6] sm:$0x3]
    %v220 = vperm.slane %v218, 0
    %v221 = vperm.slane %v218, 1
    %v240 = vunpack.c.l.b16 %v202
    %v241 = vunpack.c.h.b16 %v202
    %v242 = vunpack.c.l.b16 %v203
    %v243 = vunpack.c.h.b16 %v203
    %v244 = vunpack.c.l.b16 %v204
    %v245 = vunpack.c.h.b16 %v204
    %v246 = vunpack.c.l.b16 %v205
    %v247 = vunpack.c.h.b16 %v205
    %v248 = vunpack.c.l.b16 %v206
    %v249 = vunpack.c.h.b16 %v206
    %v250 = vunpack.c.l.b16 %v207
    %v251 = vunpack.c.h.b16 %v207
    %v252 = vunpack.c.l.b16 %v208
    %v253 = vunpack.c.h.b16 %v208
    %v254 = vunpack.c.l.b16 %v209
    %v255 = vunpack.c.h.b16 %v209
    %v256 = vunpack.c.l.b16 %v210
    %v257 = vunpack.c.h.b16 %v210
    %v258 = vunpack.c.l.b16 %v211
    %v259 = vunpack.c.h.b16 %v211
    %v260 = vunpack.c.l.b16 %v212
    %v261 = vunpack.c.h.b16 %v212
    %v262 = vunpack.c.l.b16 %v213
    %v263 = vunpack.c.h.b16 %v213
    %v264 = vunpack.c.l.b16 %v214
    %v265 = vunpack.c.h.b16 %v214
    %v266 = vunpack.c.l.b16 %v215
    %v267 = vunpack.c.h.b16 %v215
    %v268 = vunpack.c.l.b16 %v216
    %v269 = vunpack.c.h.b16 %v216
    %v270 = vunpack.c.l.b16 %v217
    %v271 = vunpack.c.h.b16 %v217
    %v272 = vpack.c.b16 %v242, %v240
    %v273 = vpack.c.b16 %v243, %v241
    %v274 = vpack.c.b16 %v246, %v244
    %v275 = vpack.c.b16 %v247, %v245
    %v276 = vpack.c.b16 %v250, %v248
    %v277 = vpack.c.b16 %v251, %v249
    %v278 = vpack.c.b16 %v254, %v252
    %v279 = vpack.c.b16 %v255, %v253
    %v280 = vpack.c.b16 %v258, %v256
    %v281 = vpack.c.b16 %v259, %v257
    %v282 = vpack.c.b16 %v262, %v260
    %v283 = vpack.c.b16 %v263, %v261
    %v284 = vpack.c.b16 %v266, %v264
    %v285 = vpack.c.b16 %v267, %v265
    %v286 = vpack.c.b16 %v270, %v268
    %v287 = vpack.c.b16 %v271, %v269
    %304 = vmatpush.bf16.msra.mxu0 %v286
    %305 = vmatpush.bf16.msra.mxu0 %v284
    %306 = vmatpush.bf16.msra.mxu0 %v282
    %307 = vmatpush.bf16.msra.mxu0 %v280
    %308 = vmatpush.bf16.msra.mxu0 %v278
    %309 = vmatpush.bf16.msra.mxu0 %v276
    %310 = vmatpush.bf16.msra.mxu0 %v274
    %311 = vmatpush.bf16.msra.mxu0 %v272
    %312 = vmatmul.bf16.gmra.mxu0 %v201
    %v313 = vpop.f32.mrf.mxu0
    %v314 = vadd.f32 %v220, %v313
    %v315 = vpop.f32.mrf.mxu0
    %316 = vdwg.mxu0
    %317 = vmatpush.bf16.msra.mxu0 %v287
    %318 = vmatpush.bf16.msra.mxu0 %v285
    %319 = vmatpush.bf16.msra.mxu0 %v283
    %320 = vmatpush.bf16.msra.mxu0 %v281
    %321 = vmatpush.bf16.msra.mxu0 %v279
    %322 = vmatpush.bf16.msra.mxu0 %v277
    %323 = vmatpush.bf16.msra.mxu0 %v275
    %324 = vmatpush.bf16.msra.mxu0 %v273
    %325 = vmatmul.bf16.gmra.mxu0 %v201
    %v326 = vpop.f32.mrf.mxu0
    %v327 = vadd.f32 %v221, %v326
    %v328 = vpop.f32.mrf.mxu0
    %329 = vdwg.mxu0
    %v330 = vmax.f32 %v314, 0.0
    %v331 = vmax.f32 %v327, 0.0
    %v332 = vpack.c.bf16 %v330, %v330
    %v333 = vpack.c.bf16 %v331, %v331
    %v334 = vld [vmem:[#allocation10] sm:$0xff]
    %v335 = vld [vmem:[#allocation10 + $0x8] sm:$0xff]
    %v336 = vld [vmem:[#allocation10 + $0x10] sm:$0xff]
    %v337 = vld [vmem:[#allocation10 + $0x18] sm:$0xff]
    %v338 = vld [vmem:[#allocation10 + $0x20] sm:$0xff]
    %v339 = vld [vmem:[#allocation10 + $0x28] sm:$0xff]
    %v340 = vld [vmem:[#allocation10 + $0x30] sm:$0xff]
    %v341 = vld [vmem:[#allocation10 + $0x38] sm:$0xff]
    %v342 = vld [vmem:[#allocation10 + $0x40] sm:$0xff]
    %v343 = vld [vmem:[#allocation10 + $0x48] sm:$0xff]
    %v344 = vld [vmem:[#allocation10 + $0x50] sm:$0xff]
    %v345 = vld [vmem:[#allocation10 + $0x58] sm:$0xff]
    %v346 = vld [vmem:[#allocation10 + $0x60] sm:$0xff]
    %v347 = vld [vmem:[#allocation10 + $0x68] sm:$0xff]
    %v348 = vld [vmem:[#allocation10 + $0x70] sm:$0xff]
    %v349 = vld [vmem:[#allocation10 + $0x78] sm:$0xff]
    %v350 = vld [vmem:[#allocation10 + $0x80] sm:$0xff]
    %v351 = vld [vmem:[#allocation10 + $0x88] sm:$0xff]
    %v352 = vld [vmem:[#allocation10 + $0x90] sm:$0xff]
    %v353 = vld [vmem:[#allocation10 + $0x98] sm:$0xff]
    %v354 = vld [vmem:[#allocation10 + $0xa0] sm:$0xff]
    %v355 = vld [vmem:[#allocation10 + $0xa8] sm:$0xff]
    %v356 = vld [vmem:[#allocation10 + $0xb0] sm:$0xff]
    %v357 = vld [vmem:[#allocation10 + $0xb8] sm:$0xff]
    %v358 = vld [vmem:[#allocation10 + $0xc0] sm:$0xff]
    %v359 = vld [vmem:[#allocation10 + $0xc8] sm:$0xff]
    %v360 = vld [vmem:[#allocation10 + $0xd0] sm:$0xff]
    %v361 = vld [vmem:[#allocation10 + $0xd8] sm:$0xff]
    %v362 = vld [vmem:[#allocation10 + $0xe0] sm:$0xff]
    %v363 = vld [vmem:[#allocation10 + $0xe8] sm:$0xff]
    %v364 = vld [vmem:[#allocation10 + $0xf0] sm:$0xff]
    %v365 = vld [vmem:[#allocation10 + $0xf8] sm:$0xff]
    %v366 = vld [vmem:[#allocation10 + $0x100] sm:$0xff]
    %v367 = vld [vmem:[#allocation10 + $0x108] sm:$0xff]
    %v368 = vld [vmem:[#allocation10 + $0x110] sm:$0xff]
    %v369 = vld [vmem:[#allocation10 + $0x118] sm:$0xff]
    %v370 = vld [vmem:[#allocation10 + $0x120] sm:$0xff]
    %v371 = vld [vmem:[#allocation10 + $0x128] sm:$0xff]
    %v372 = vld [vmem:[#allocation10 + $0x130] sm:$0xff]
    %v373 = vld [vmem:[#allocation10 + $0x138] sm:$0xff]
    %v374 = vld [vmem:[#allocation10 + $0x140] sm:$0xff]
    %v375 = vld [vmem:[#allocation10 + $0x148] sm:$0xff]
    %v376 = vld [vmem:[#allocation10 + $0x150] sm:$0xff]
    %v377 = vld [vmem:[#allocation10 + $0x158] sm:$0xff]
    %v378 = vld [vmem:[#allocation10 + $0x160] sm:$0xff]
    %v379 = vld [vmem:[#allocation10 + $0x168] sm:$0xff]
    %v380 = vld [vmem:[#allocation10 + $0x170] sm:$0xff]
    %v381 = vld [vmem:[#allocation10 + $0x178] sm:$0xff]
    %v382 = vld [vmem:[#allocation10 + $0x180] sm:$0xff]
    %v383 = vld [vmem:[#allocation10 + $0x188] sm:$0xff]
    %v384 = vld [vmem:[#allocation10 + $0x190] sm:$0xff]
    %v385 = vld [vmem:[#allocation10 + $0x198] sm:$0xff]
    %v386 = vld [vmem:[#allocation10 + $0x1a0] sm:$0xff]
    %v387 = vld [vmem:[#allocation10 + $0x1a8] sm:$0xff]
    %v388 = vld [vmem:[#allocation10 + $0x1b0] sm:$0xff]
    %v389 = vld [vmem:[#allocation10 + $0x1b8] sm:$0xff]
    %v390 = vld [vmem:[#allocation10 + $0x1c0] sm:$0xff]
    %v391 = vld [vmem:[#allocation10 + $0x1c8] sm:$0xff]
    %v392 = vld [vmem:[#allocation10 + $0x1d0] sm:$0xff]
    %v393 = vld [vmem:[#allocation10 + $0x1d8] sm:$0xff]
    %v394 = vld [vmem:[#allocation10 + $0x1e0] sm:$0xff]
    %v395 = vld [vmem:[#allocation10 + $0x1e8] sm:$0xff]
    %v396 = vld [vmem:[#allocation10 + $0x1f0] sm:$0xff]
    %v397 = vld [vmem:[#allocation10 + $0x1f8] sm:$0xff]
    %v398 = vld [vmem:[%s8] sm:$0xf]
    %v400 = vperm.slane %v398, 0
    %v401 = vperm.slane %v398, 1
    %v402 = vperm.slane %v398, 2
    %v403 = vperm.slane %v398, 3
    %v472 = vunpack.c.l.b16 %v334
    %v473 = vunpack.c.h.b16 %v334
    %v474 = vunpack.c.l.b16 %v335
    %v475 = vunpack.c.h.b16 %v335
    %v476 = vunpack.c.l.b16 %v336
    %v477 = vunpack.c.h.b16 %v336
    %v478 = vunpack.c.l.b16 %v337
    %v479 = vunpack.c.h.b16 %v337
    %v480 = vunpack.c.l.b16 %v338
    %v481 = vunpack.c.h.b16 %v338
    %v482 = vunpack.c.l.b16 %v339
    %v483 = vunpack.c.h.b16 %v339
    %v484 = vunpack.c.l.b16 %v340
    %v485 = vunpack.c.h.b16 %v340
    %v486 = vunpack.c.l.b16 %v341
    %v487 = vunpack.c.h.b16 %v341
    %v488 = vunpack.c.l.b16 %v342
    %v489 = vunpack.c.h.b16 %v342
    %v490 = vunpack.c.l.b16 %v343
    %v491 = vunpack.c.h.b16 %v343
    %v492 = vunpack.c.l.b16 %v344
    %v493 = vunpack.c.h.b16 %v344
    %v494 = vunpack.c.l.b16 %v345
    %v495 = vunpack.c.h.b16 %v345
    %v496 = vunpack.c.l.b16 %v346
    %v497 = vunpack.c.h.b16 %v346
    %v498 = vunpack.c.l.b16 %v347
    %v499 = vunpack.c.h.b16 %v347
    %v500 = vunpack.c.l.b16 %v348
    %v501 = vunpack.c.h.b16 %v348
    %v502 = vunpack.c.l.b16 %v349
    %v503 = vunpack.c.h.b16 %v349
    %v504 = vunpack.c.l.b16 %v350
    %v505 = vunpack.c.h.b16 %v350
    %v506 = vunpack.c.l.b16 %v351
    %v507 = vunpack.c.h.b16 %v351
    %v508 = vunpack.c.l.b16 %v352
    %v509 = vunpack.c.h.b16 %v352
    %v510 = vunpack.c.l.b16 %v353
    %v511 = vunpack.c.h.b16 %v353
    %v512 = vunpack.c.l.b16 %v354
    %v513 = vunpack.c.h.b16 %v354
    %v514 = vunpack.c.l.b16 %v355
    %v515 = vunpack.c.h.b16 %v355
    %v516 = vunpack.c.l.b16 %v356
    %v517 = vunpack.c.h.b16 %v356
    %v518 = vunpack.c.l.b16 %v357
    %v519 = vunpack.c.h.b16 %v357
    %v520 = vunpack.c.l.b16 %v358
    %v521 = vunpack.c.h.b16 %v358
    %v522 = vunpack.c.l.b16 %v359
    %v523 = vunpack.c.h.b16 %v359
    %v524 = vunpack.c.l.b16 %v360
    %v525 = vunpack.c.h.b16 %v360
    %v526 = vunpack.c.l.b16 %v361
    %v527 = vunpack.c.h.b16 %v361
    %v528 = vunpack.c.l.b16 %v362
    %v529 = vunpack.c.h.b16 %v362
    %v530 = vunpack.c.l.b16 %v363
    %v531 = vunpack.c.h.b16 %v363
    %v532 = vunpack.c.l.b16 %v364
    %v533 = vunpack.c.h.b16 %v364
    %v534 = vunpack.c.l.b16 %v365
    %v535 = vunpack.c.h.b16 %v365
    %v536 = vunpack.c.l.b16 %v366
    %v537 = vunpack.c.h.b16 %v366
    %v538 = vunpack.c.l.b16 %v367
    %v539 = vunpack.c.h.b16 %v367
    %v540 = vunpack.c.l.b16 %v368
    %v541 = vunpack.c.h.b16 %v368
    %v542 = vunpack.c.l.b16 %v369
    %v543 = vunpack.c.h.b16 %v369
    %v544 = vunpack.c.l.b16 %v370
    %v545 = vunpack.c.h.b16 %v370
    %v546 = vunpack.c.l.b16 %v371
    %v547 = vunpack.c.h.b16 %v371
    %v548 = vunpack.c.l.b16 %v372
    %v549 = vunpack.c.h.b16 %v372
    %v550 = vunpack.c.l.b16 %v373
    %v551 = vunpack.c.h.b16 %v373
    %v552 = vunpack.c.l.b16 %v374
    %v553 = vunpack.c.h.b16 %v374
    %v554 = vunpack.c.l.b16 %v375
    %v555 = vunpack.c.h.b16 %v375
    %v556 = vunpack.c.l.b16 %v376
    %v557 = vunpack.c.h.b16 %v376
    %v558 = vunpack.c.l.b16 %v377
    %v559 = vunpack.c.h.b16 %v377
    %v560 = vunpack.c.l.b16 %v378
    %v561 = vunpack.c.h.b16 %v378
    %v562 = vunpack.c.l.b16 %v379
    %v563 = vunpack.c.h.b16 %v379
    %v564 = vunpack.c.l.b16 %v380
    %v565 = vunpack.c.h.b16 %v380
    %v566 = vunpack.c.l.b16 %v381
    %v567 = vunpack.c.h.b16 %v381
    %v568 = vunpack.c.l.b16 %v382
    %v569 = vunpack.c.h.b16 %v382
    %v570 = vunpack.c.l.b16 %v383
    %v571 = vunpack.c.h.b16 %v383
    %v572 = vunpack.c.l.b16 %v384
    %v573 = vunpack.c.h.b16 %v384
    %v574 = vunpack.c.l.b16 %v385
    %v575 = vunpack.c.h.b16 %v385
    %v576 = vunpack.c.l.b16 %v386
    %v577 = vunpack.c.h.b16 %v386
    %v578 = vunpack.c.l.b16 %v387
    %v579 = vunpack.c.h.b16 %v387
    %v580 = vunpack.c.l.b16 %v388
    %v581 = vunpack.c.h.b16 %v388
    %v582 = vunpack.c.l.b16 %v389
    %v583 = vunpack.c.h.b16 %v389
    %v584 = vunpack.c.l.b16 %v390
    %v585 = vunpack.c.h.b16 %v390
    %v586 = vunpack.c.l.b16 %v391
    %v587 = vunpack.c.h.b16 %v391
    %v588 = vunpack.c.l.b16 %v392
    %v589 = vunpack.c.h.b16 %v392
    %v590 = vunpack.c.l.b16 %v393
    %v591 = vunpack.c.h.b16 %v393
    %v592 = vunpack.c.l.b16 %v394
    %v593 = vunpack.c.h.b16 %v394
    %v594 = vunpack.c.l.b16 %v395
    %v595 = vunpack.c.h.b16 %v395
    %v596 = vunpack.c.l.b16 %v396
    %v597 = vunpack.c.h.b16 %v396
    %v598 = vunpack.c.l.b16 %v397
    %v599 = vunpack.c.h.b16 %v397
    %v600 = vpack.c.b16 %v476, %v472
    %v601 = vpack.c.b16 %v477, %v473
    %v602 = vpack.c.b16 %v478, %v474
    %v603 = vpack.c.b16 %v479, %v475
    %v604 = vpack.c.b16 %v484, %v480
    %v605 = vpack.c.b16 %v485, %v481
    %v606 = vpack.c.b16 %v486, %v482
    %v607 = vpack.c.b16 %v487, %v483
    %v608 = vpack.c.b16 %v492, %v488
    %v609 = vpack.c.b16 %v493, %v489
    %v610 = vpack.c.b16 %v494, %v490
    %v611 = vpack.c.b16 %v495, %v491
    %v612 = vpack.c.b16 %v500, %v496
    %v613 = vpack.c.b16 %v501, %v497
    %v614 = vpack.c.b16 %v502, %v498
    %v615 = vpack.c.b16 %v503, %v499
    %v616 = vpack.c.b16 %v508, %v504
    %v617 = vpack.c.b16 %v509, %v505
    %v618 = vpack.c.b16 %v510, %v506
    %v619 = vpack.c.b16 %v511, %v507
    %v620 = vpack.c.b16 %v516, %v512
    %v621 = vpack.c.b16 %v517, %v513
    %v622 = vpack.c.b16 %v518, %v514
    %v623 = vpack.c.b16 %v519, %v515
    %v624 = vpack.c.b16 %v524, %v520
    %v625 = vpack.c.b16 %v525, %v521
    %v626 = vpack.c.b16 %v526, %v522
    %v627 = vpack.c.b16 %v527, %v523
    %v628 = vpack.c.b16 %v532, %v528
    %v629 = vpack.c.b16 %v533, %v529
    %v630 = vpack.c.b16 %v534, %v530
    %v631 = vpack.c.b16 %v535, %v531
    %v632 = vpack.c.b16 %v540, %v536
    %v633 = vpack.c.b16 %v541, %v537
    %v634 = vpack.c.b16 %v542, %v538
    %v635 = vpack.c.b16 %v543, %v539
    %v636 = vpack.c.b16 %v548, %v544
    %v637 = vpack.c.b16 %v549, %v545
    %v638 = vpack.c.b16 %v550, %v546
    %v639 = vpack.c.b16 %v551, %v547
    %v640 = vpack.c.b16 %v556, %v552
    %v641 = vpack.c.b16 %v557, %v553
    %v642 = vpack.c.b16 %v558, %v554
    %v643 = vpack.c.b16 %v559, %v555
    %v644 = vpack.c.b16 %v564, %v560
    %v645 = vpack.c.b16 %v565, %v561
    %v646 = vpack.c.b16 %v566, %v562
    %v647 = vpack.c.b16 %v567, %v563
    %v648 = vpack.c.b16 %v572, %v568
    %v649 = vpack.c.b16 %v573, %v569
    %v650 = vpack.c.b16 %v574, %v570
    %v651 = vpack.c.b16 %v575, %v571
    %v652 = vpack.c.b16 %v580, %v576
    %v653 = vpack.c.b16 %v581, %v577
    %v654 = vpack.c.b16 %v582, %v578
    %v655 = vpack.c.b16 %v583, %v579
    %v656 = vpack.c.b16 %v588, %v584
    %v657 = vpack.c.b16 %v589, %v585
    %v658 = vpack.c.b16 %v590, %v586
    %v659 = vpack.c.b16 %v591, %v587
    %v660 = vpack.c.b16 %v596, %v592
    %v661 = vpack.c.b16 %v597, %v593
    %v662 = vpack.c.b16 %v598, %v594
    %v663 = vpack.c.b16 %v599, %v595
    %728 = vmatpush.bf16.msra.mxu0 %v628
    %729 = vmatpush.bf16.msra.mxu0 %v624
    %730 = vmatpush.bf16.msra.mxu0 %v620
    %731 = vmatpush.bf16.msra.mxu0 %v616
    %732 = vmatpush.bf16.msra.mxu0 %v612
    %733 = vmatpush.bf16.msra.mxu0 %v608
    %734 = vmatpush.bf16.msra.mxu0 %v604
    %735 = vmatpush.bf16.msra.mxu0 %v600
    %736 = vmatmul.bf16.gmra.mxu0 %v332
    %v737 = vpop.f32.mrf.mxu0
    %v738 = vadd.f32 %v400, %v737
    %v739 = vpop.f32.mrf.mxu0
    %740 = vdwg.mxu0
    %741 = vmatpush.bf16.msra.mxu0 %v660
    %742 = vmatpush.bf16.msra.mxu0 %v656
    %743 = vmatpush.bf16.msra.mxu0 %v652
    %744 = vmatpush.bf16.msra.mxu0 %v648
    %745 = vmatpush.bf16.msra.mxu0 %v644
    %746 = vmatpush.bf16.msra.mxu0 %v640
    %747 = vmatpush.bf16.msra.mxu0 %v636
    %748 = vmatpush.bf16.msra.mxu0 %v632
    %749 = vmatmul.bf16.gmra.mxu0 %v333
    %v750 = vpop.f32.mrf.mxu0
    %v751 = vadd.f32 %v738, %v750
    %v752 = vpop.f32.mrf.mxu0
    %753 = vdwg.mxu0
    %754 = vmatpush.bf16.msra.mxu0 %v629
    %755 = vmatpush.bf16.msra.mxu0 %v625
    %756 = vmatpush.bf16.msra.mxu0 %v621
    %757 = vmatpush.bf16.msra.mxu0 %v617
    %758 = vmatpush.bf16.msra.mxu0 %v613
    %759 = vmatpush.bf16.msra.mxu0 %v609
    %760 = vmatpush.bf16.msra.mxu0 %v605
    %761 = vmatpush.bf16.msra.mxu0 %v601
    %762 = vmatmul.bf16.gmra.mxu0 %v332
    %v763 = vpop.f32.mrf.mxu0
    %v764 = vadd.f32 %v401, %v763
    %v765 = vpop.f32.mrf.mxu0
    %766 = vdwg.mxu0
    %767 = vmatpush.bf16.msra.mxu0 %v661
    %768 = vmatpush.bf16.msra.mxu0 %v657
    %769 = vmatpush.bf16.msra.mxu0 %v653
    %770 = vmatpush.bf16.msra.mxu0 %v649
    %771 = vmatpush.bf16.msra.mxu0 %v645
    %772 = vmatpush.bf16.msra.mxu0 %v641
    %773 = vmatpush.bf16.msra.mxu0 %v637
    %774 = vmatpush.bf16.msra.mxu0 %v633
    %775 = vmatmul.bf16.gmra.mxu0 %v333
    %v776 = vpop.f32.mrf.mxu0
    %v777 = vadd.f32 %v764, %v776
    %v778 = vpop.f32.mrf.mxu0
    %779 = vdwg.mxu0
    %780 = vmatpush.bf16.msra.mxu0 %v630
    %781 = vmatpush.bf16.msra.mxu0 %v626
    %782 = vmatpush.bf16.msra.mxu0 %v622
    %783 = vmatpush.bf16.msra.mxu0 %v618
    %784 = vmatpush.bf16.msra.mxu0 %v614
    %785 = vmatpush.bf16.msra.mxu0 %v610
    %786 = vmatpush.bf16.msra.mxu0 %v606
    %787 = vmatpush.bf16.msra.mxu0 %v602
    %788 = vmatmul.bf16.gmra.mxu0 %v332
    %v789 = vpop.f32.mrf.mxu0
    %v790 = vadd.f32 %v402, %v789
    %v791 = vpop.f32.mrf.mxu0
    %792 = vdwg.mxu0
    %793 = vmatpush.bf16.msra.mxu0 %v662
    %794 = vmatpush.bf16.msra.mxu0 %v658
    %795 = vmatpush.bf16.msra.mxu0 %v654
    %796 = vmatpush.bf16.msra.mxu0 %v650
    %797 = vmatpush.bf16.msra.mxu0 %v646
    %798 = vmatpush.bf16.msra.mxu0 %v642
    %799 = vmatpush.bf16.msra.mxu0 %v638
    %800 = vmatpush.bf16.msra.mxu0 %v634
    %801 = vmatmul.bf16.gmra.mxu0 %v333
    %v802 = vpop.f32.mrf.mxu0
    %v803 = vadd.f32 %v790, %v802
    %v804 = vpop.f32.mrf.mxu0
    %805 = vdwg.mxu0
    %806 = vmatpush.bf16.msra.mxu0 %v631
    %807 = vmatpush.bf16.msra.mxu0 %v627
    %808 = vmatpush.bf16.msra.mxu0 %v623
    %809 = vmatpush.bf16.msra.mxu0 %v619
    %810 = vmatpush.bf16.msra.mxu0 %v615
    %811 = vmatpush.bf16.msra.mxu0 %v611
    %812 = vmatpush.bf16.msra.mxu0 %v607
    %813 = vmatpush.bf16.msra.mxu0 %v603
    %814 = vmatmul.bf16.gmra.mxu0 %v332
    %v815 = vpop.f32.mrf.mxu0
    %v816 = vadd.f32 %v403, %v815
    %v817 = vpop.f32.mrf.mxu0
    %818 = vdwg.mxu0
    %819 = vmatpush.bf16.msra.mxu0 %v663
    %820 = vmatpush.bf16.msra.mxu0 %v659
    %821 = vmatpush.bf16.msra.mxu0 %v655
    %822 = vmatpush.bf16.msra.mxu0 %v651
    %823 = vmatpush.bf16.msra.mxu0 %v647
    %824 = vmatpush.bf16.msra.mxu0 %v643
    %825 = vmatpush.bf16.msra.mxu0 %v639
    %826 = vmatpush.bf16.msra.mxu0 %v635
    %827 = vmatmul.bf16.gmra.mxu0 %v333
    %v828 = vpop.f32.mrf.mxu0
    %v829 = vadd.f32 %v816, %v828
    %v830 = vpop.f32.mrf.mxu0
    %831 = vdwg.mxu0
    %v832 = vmax.f32 %v751, 0.0
    %v833 = vmax.f32 %v777, 0.0
    %v834 = vmax.f32 %v803, 0.0
    %v835 = vmax.f32 %v829, 0.0
    %v836 = vpack.c.bf16 %v832, %v832
    %v837 = vpack.c.bf16 %v833, %v833
    %v838 = vpack.c.bf16 %v834, %v834
    %v839 = vpack.c.bf16 %v835, %v835
    %v840 = vld [vmem:[#allocation11] sm:$0xff]
    %v841 = vld [vmem:[#allocation11 + $0x8] sm:$0xff]
    %v842 = vld [vmem:[#allocation11 + $0x10] sm:$0xff]
    %v843 = vld [vmem:[#allocation11 + $0x18] sm:$0xff]
    %v844 = vld [vmem:[#allocation11 + $0x20] sm:$0xff]
    %v845 = vld [vmem:[#allocation11 + $0x28] sm:$0xff]
    %v846 = vld [vmem:[#allocation11 + $0x30] sm:$0xff]
    %v847 = vld [vmem:[#allocation11 + $0x38] sm:$0xff]
    %v848 = vld [vmem:[#allocation11 + $0x40] sm:$0xff]
    %v849 = vld [vmem:[#allocation11 + $0x48] sm:$0xff]
    %v850 = vld [vmem:[#allocation11 + $0x50] sm:$0xff]
    %v851 = vld [vmem:[#allocation11 + $0x58] sm:$0xff]
    %v852 = vld [vmem:[#allocation11 + $0x60] sm:$0xff]
    %v853 = vld [vmem:[#allocation11 + $0x68] sm:$0xff]
    %v854 = vld [vmem:[#allocation11 + $0x70] sm:$0xff]
    %v855 = vld [vmem:[#allocation11 + $0x78] sm:$0xff]
    %v856 = vld [vmem:[#allocation11 + $0x80] sm:$0xff]
    %v857 = vld [vmem:[#allocation11 + $0x88] sm:$0xff]
    %v858 = vld [vmem:[#allocation11 + $0x90] sm:$0xff]
    %v859 = vld [vmem:[#allocation11 + $0x98] sm:$0xff]
    %v860 = vld [vmem:[#allocation11 + $0xa0] sm:$0xff]
    %v861 = vld [vmem:[#allocation11 + $0xa8] sm:$0xff]
    %v862 = vld [vmem:[#allocation11 + $0xb0] sm:$0xff]
    %v863 = vld [vmem:[#allocation11 + $0xb8] sm:$0xff]
    %v864 = vld [vmem:[#allocation11 + $0xc0] sm:$0xff]
    %v865 = vld [vmem:[#allocation11 + $0xc8] sm:$0xff]
    %v866 = vld [vmem:[#allocation11 + $0xd0] sm:$0xff]
    %v867 = vld [vmem:[#allocation11 + $0xd8] sm:$0xff]
    %v868 = vld [vmem:[#allocation11 + $0xe0] sm:$0xff]
    %v869 = vld [vmem:[#allocation11 + $0xe8] sm:$0xff]
    %v870 = vld [vmem:[#allocation11 + $0xf0] sm:$0xff]
    %v871 = vld [vmem:[#allocation11 + $0xf8] sm:$0xff]
    %v872 = vld [vmem:[#allocation11 + $0x100] sm:$0xff]
    %v873 = vld [vmem:[#allocation11 + $0x108] sm:$0xff]
    %v874 = vld [vmem:[#allocation11 + $0x110] sm:$0xff]
    %v875 = vld [vmem:[#allocation11 + $0x118] sm:$0xff]
    %v876 = vld [vmem:[#allocation11 + $0x120] sm:$0xff]
    %v877 = vld [vmem:[#allocation11 + $0x128] sm:$0xff]
    %v878 = vld [vmem:[#allocation11 + $0x130] sm:$0xff]
    %v879 = vld [vmem:[#allocation11 + $0x138] sm:$0xff]
    %v880 = vld [vmem:[#allocation11 + $0x140] sm:$0xff]
    %v881 = vld [vmem:[#allocation11 + $0x148] sm:$0xff]
    %v882 = vld [vmem:[#allocation11 + $0x150] sm:$0xff]
    %v883 = vld [vmem:[#allocation11 + $0x158] sm:$0xff]
    %v884 = vld [vmem:[#allocation11 + $0x160] sm:$0xff]
    %v885 = vld [vmem:[#allocation11 + $0x168] sm:$0xff]
    %v886 = vld [vmem:[#allocation11 + $0x170] sm:$0xff]
    %v887 = vld [vmem:[#allocation11 + $0x178] sm:$0xff]
    %v888 = vld [vmem:[#allocation11 + $0x180] sm:$0xff]
    %v889 = vld [vmem:[#allocation11 + $0x188] sm:$0xff]
    %v890 = vld [vmem:[#allocation11 + $0x190] sm:$0xff]
    %v891 = vld [vmem:[#allocation11 + $0x198] sm:$0xff]
    %v892 = vld [vmem:[#allocation11 + $0x1a0] sm:$0xff]
    %v893 = vld [vmem:[#allocation11 + $0x1a8] sm:$0xff]
    %v894 = vld [vmem:[#allocation11 + $0x1b0] sm:$0xff]
    %v895 = vld [vmem:[#allocation11 + $0x1b8] sm:$0xff]
    %v896 = vld [vmem:[#allocation11 + $0x1c0] sm:$0xff]
    %v897 = vld [vmem:[#allocation11 + $0x1c8] sm:$0xff]
    %v898 = vld [vmem:[#allocation11 + $0x1d0] sm:$0xff]
    %v899 = vld [vmem:[#allocation11 + $0x1d8] sm:$0xff]
    %v900 = vld [vmem:[#allocation11 + $0x1e0] sm:$0xff]
    %v901 = vld [vmem:[#allocation11 + $0x1e8] sm:$0xff]
    %v902 = vld [vmem:[#allocation11 + $0x1f0] sm:$0xff]
    %v903 = vld [vmem:[#allocation11 + $0x1f8] sm:$0xff]
    %v904 = vld [vmem:[%s10] sm:$0x3]
    %v906 = vperm.slane %v904, 0
    %v907 = vperm.slane %v904, 1
    %v974 = vunpack.c.l.b16 %v840
    %v975 = vunpack.c.h.b16 %v840
    %v976 = vunpack.c.l.b16 %v841
    %v977 = vunpack.c.h.b16 %v841
    %v978 = vunpack.c.l.b16 %v842
    %v979 = vunpack.c.h.b16 %v842
    %v980 = vunpack.c.l.b16 %v843
    %v981 = vunpack.c.h.b16 %v843
    %v982 = vunpack.c.l.b16 %v844
    %v983 = vunpack.c.h.b16 %v844
    %v984 = vunpack.c.l.b16 %v845
    %v985 = vunpack.c.h.b16 %v845
    %v986 = vunpack.c.l.b16 %v846
    %v987 = vunpack.c.h.b16 %v846
    %v988 = vunpack.c.l.b16 %v847
    %v989 = vunpack.c.h.b16 %v847
    %v990 = vunpack.c.l.b16 %v848
    %v991 = vunpack.c.h.b16 %v848
    %v992 = vunpack.c.l.b16 %v849
    %v993 = vunpack.c.h.b16 %v849
    %v994 = vunpack.c.l.b16 %v850
    %v995 = vunpack.c.h.b16 %v850
    %v996 = vunpack.c.l.b16 %v851
    %v997 = vunpack.c.h.b16 %v851
    %v998 = vunpack.c.l.b16 %v852
    %v999 = vunpack.c.h.b16 %v852
    %v1000 = vunpack.c.l.b16 %v853
    %v1001 = vunpack.c.h.b16 %v853
    %v1002 = vunpack.c.l.b16 %v854
    %v1003 = vunpack.c.h.b16 %v854
    %v1004 = vunpack.c.l.b16 %v855
    %v1005 = vunpack.c.h.b16 %v855
    %v1006 = vunpack.c.l.b16 %v856
    %v1007 = vunpack.c.h.b16 %v856
    %v1008 = vunpack.c.l.b16 %v857
    %v1009 = vunpack.c.h.b16 %v857
    %v1010 = vunpack.c.l.b16 %v858
    %v1011 = vunpack.c.h.b16 %v858
    %v1012 = vunpack.c.l.b16 %v859
    %v1013 = vunpack.c.h.b16 %v859
    %v1014 = vunpack.c.l.b16 %v860
    %v1015 = vunpack.c.h.b16 %v860
    %v1016 = vunpack.c.l.b16 %v861
    %v1017 = vunpack.c.h.b16 %v861
    %v1018 = vunpack.c.l.b16 %v862
    %v1019 = vunpack.c.h.b16 %v862
    %v1020 = vunpack.c.l.b16 %v863
    %v1021 = vunpack.c.h.b16 %v863
    %v1022 = vunpack.c.l.b16 %v864
    %v1023 = vunpack.c.h.b16 %v864
    %v1024 = vunpack.c.l.b16 %v865
    %v1025 = vunpack.c.h.b16 %v865
    %v1026 = vunpack.c.l.b16 %v866
    %v1027 = vunpack.c.h.b16 %v866
    %v1028 = vunpack.c.l.b16 %v867
    %v1029 = vunpack.c.h.b16 %v867
    %v1030 = vunpack.c.l.b16 %v868
    %v1031 = vunpack.c.h.b16 %v868
    %v1032 = vunpack.c.l.b16 %v869
    %v1033 = vunpack.c.h.b16 %v869
    %v1034 = vunpack.c.l.b16 %v870
    %v1035 = vunpack.c.h.b16 %v870
    %v1036 = vunpack.c.l.b16 %v871
    %v1037 = vunpack.c.h.b16 %v871
    %v1038 = vunpack.c.l.b16 %v872
    %v1039 = vunpack.c.h.b16 %v872
    %v1040 = vunpack.c.l.b16 %v873
    %v1041 = vunpack.c.h.b16 %v873
    %v1042 = vunpack.c.l.b16 %v874
    %v1043 = vunpack.c.h.b16 %v874
    %v1044 = vunpack.c.l.b16 %v875
    %v1045 = vunpack.c.h.b16 %v875
    %v1046 = vunpack.c.l.b16 %v876
    %v1047 = vunpack.c.h.b16 %v876
    %v1048 = vunpack.c.l.b16 %v877
    %v1049 = vunpack.c.h.b16 %v877
    %v1050 = vunpack.c.l.b16 %v878
    %v1051 = vunpack.c.h.b16 %v878
    %v1052 = vunpack.c.l.b16 %v879
    %v1053 = vunpack.c.h.b16 %v879
    %v1054 = vunpack.c.l.b16 %v880
    %v1055 = vunpack.c.h.b16 %v880
    %v1056 = vunpack.c.l.b16 %v881
    %v1057 = vunpack.c.h.b16 %v881
    %v1058 = vunpack.c.l.b16 %v882
    %v1059 = vunpack.c.h.b16 %v882
    %v1060 = vunpack.c.l.b16 %v883
    %v1061 = vunpack.c.h.b16 %v883
    %v1062 = vunpack.c.l.b16 %v884
    %v1063 = vunpack.c.h.b16 %v884
    %v1064 = vunpack.c.l.b16 %v885
    %v1065 = vunpack.c.h.b16 %v885
    %v1066 = vunpack.c.l.b16 %v886
    %v1067 = vunpack.c.h.b16 %v886
    %v1068 = vunpack.c.l.b16 %v887
    %v1069 = vunpack.c.h.b16 %v887
    %v1070 = vunpack.c.l.b16 %v888
    %v1071 = vunpack.c.h.b16 %v888
    %v1072 = vunpack.c.l.b16 %v889
    %v1073 = vunpack.c.h.b16 %v889
    %v1074 = vunpack.c.l.b16 %v890
    %v1075 = vunpack.c.h.b16 %v890
    %v1076 = vunpack.c.l.b16 %v891
    %v1077 = vunpack.c.h.b16 %v891
    %v1078 = vunpack.c.l.b16 %v892
    %v1079 = vunpack.c.h.b16 %v892
    %v1080 = vunpack.c.l.b16 %v893
    %v1081 = vunpack.c.h.b16 %v893
    %v1082 = vunpack.c.l.b16 %v894
    %v1083 = vunpack.c.h.b16 %v894
    %v1084 = vunpack.c.l.b16 %v895
    %v1085 = vunpack.c.h.b16 %v895
    %v1086 = vunpack.c.l.b16 %v896
    %v1087 = vunpack.c.h.b16 %v896
    %v1088 = vunpack.c.l.b16 %v897
    %v1089 = vunpack.c.h.b16 %v897
    %v1090 = vunpack.c.l.b16 %v898
    %v1091 = vunpack.c.h.b16 %v898
    %v1092 = vunpack.c.l.b16 %v899
    %v1093 = vunpack.c.h.b16 %v899
    %v1094 = vunpack.c.l.b16 %v900
    %v1095 = vunpack.c.h.b16 %v900
    %v1096 = vunpack.c.l.b16 %v901
    %v1097 = vunpack.c.h.b16 %v901
    %v1098 = vunpack.c.l.b16 %v902
    %v1099 = vunpack.c.h.b16 %v902
    %v1100 = vunpack.c.l.b16 %v903
    %v1101 = vunpack.c.h.b16 %v903
    %v1102 = vpack.c.b16 %v976, %v974
    %v1103 = vpack.c.b16 %v977, %v975
    %v1104 = vpack.c.b16 %v980, %v978
    %v1105 = vpack.c.b16 %v981, %v979
    %v1106 = vpack.c.b16 %v984, %v982
    %v1107 = vpack.c.b16 %v985, %v983
    %v1108 = vpack.c.b16 %v988, %v986
    %v1109 = vpack.c.b16 %v989, %v987
    %v1110 = vpack.c.b16 %v992, %v990
    %v1111 = vpack.c.b16 %v993, %v991
    %v1112 = vpack.c.b16 %v996, %v994
    %v1113 = vpack.c.b16 %v997, %v995
    %v1114 = vpack.c.b16 %v1000, %v998
    %v1115 = vpack.c.b16 %v1001, %v999
    %v1116 = vpack.c.b16 %v1004, %v1002
    %v1117 = vpack.c.b16 %v1005, %v1003
    %v1118 = vpack.c.b16 %v1008, %v1006
    %v1119 = vpack.c.b16 %v1009, %v1007
    %v1120 = vpack.c.b16 %v1012, %v1010
    %v1121 = vpack.c.b16 %v1013, %v1011
    %v1122 = vpack.c.b16 %v1016, %v1014
    %v1123 = vpack.c.b16 %v1017, %v1015
    %v1124 = vpack.c.b16 %v1020, %v1018
    %v1125 = vpack.c.b16 %v1021, %v1019
    %v1126 = vpack.c.b16 %v1024, %v1022
    %v1127 = vpack.c.b16 %v1025, %v1023
    %v1128 = vpack.c.b16 %v1028, %v1026
    %v1129 = vpack.c.b16 %v1029, %v1027
    %v1130 = vpack.c.b16 %v1032, %v1030
    %v1131 = vpack.c.b16 %v1033, %v1031
    %v1132 = vpack.c.b16 %v1036, %v1034
    %v1133 = vpack.c.b16 %v1037, %v1035
    %v1134 = vpack.c.b16 %v1040, %v1038
    %v1135 = vpack.c.b16 %v1041, %v1039
    %v1136 = vpack.c.b16 %v1044, %v1042
    %v1137 = vpack.c.b16 %v1045, %v1043
    %v1138 = vpack.c.b16 %v1048, %v1046
    %v1139 = vpack.c.b16 %v1049, %v1047
    %v1140 = vpack.c.b16 %v1052, %v1050
    %v1141 = vpack.c.b16 %v1053, %v1051
    %v1142 = vpack.c.b16 %v1056, %v1054
    %v1143 = vpack.c.b16 %v1057, %v1055
    %v1144 = vpack.c.b16 %v1060, %v1058
    %v1145 = vpack.c.b16 %v1061, %v1059
    %v1146 = vpack.c.b16 %v1064, %v1062
    %v1147 = vpack.c.b16 %v1065, %v1063
    %v1148 = vpack.c.b16 %v1068, %v1066
    %v1149 = vpack.c.b16 %v1069, %v1067
    %v1150 = vpack.c.b16 %v1072, %v1070
    %v1151 = vpack.c.b16 %v1073, %v1071
    %v1152 = vpack.c.b16 %v1076, %v1074
    %v1153 = vpack.c.b16 %v1077, %v1075
    %v1154 = vpack.c.b16 %v1080, %v1078
    %v1155 = vpack.c.b16 %v1081, %v1079
    %v1156 = vpack.c.b16 %v1084, %v1082
    %v1157 = vpack.c.b16 %v1085, %v1083
    %v1158 = vpack.c.b16 %v1088, %v1086
    %v1159 = vpack.c.b16 %v1089, %v1087
    %v1160 = vpack.c.b16 %v1092, %v1090
    %v1161 = vpack.c.b16 %v1093, %v1091
    %v1162 = vpack.c.b16 %v1096, %v1094
    %v1163 = vpack.c.b16 %v1097, %v1095
    %v1164 = vpack.c.b16 %v1100, %v1098
    %v1165 = vpack.c.b16 %v1101, %v1099
    %1230 = vmatpush.bf16.msra.mxu0 %v1116
    %1231 = vmatpush.bf16.msra.mxu0 %v1114
    %1232 = vmatpush.bf16.msra.mxu0 %v1112
    %1233 = vmatpush.bf16.msra.mxu0 %v1110
    %1234 = vmatpush.bf16.msra.mxu0 %v1108
    %1235 = vmatpush.bf16.msra.mxu0 %v1106
    %1236 = vmatpush.bf16.msra.mxu0 %v1104
    %1237 = vmatpush.bf16.msra.mxu0 %v1102
    %1238 = vmatmul.bf16.gmra.mxu0 %v836
    %v1239 = vpop.f32.mrf.mxu0
    %v1240 = vadd.f32 %v906, %v1239
    %v1241 = vpop.f32.mrf.mxu0
    %1242 = vdwg.mxu0
    %1243 = vmatpush.bf16.msra.mxu0 %v1132
    %1244 = vmatpush.bf16.msra.mxu0 %v1130
    %1245 = vmatpush.bf16.msra.mxu0 %v1128
    %1246 = vmatpush.bf16.msra.mxu0 %v1126
    %1247 = vmatpush.bf16.msra.mxu0 %v1124
    %1248 = vmatpush.bf16.msra.mxu0 %v1122
    %1249 = vmatpush.bf16.msra.mxu0 %v1120
    %1250 = vmatpush.bf16.msra.mxu0 %v1118
    %1251 = vmatmul.bf16.gmra.mxu0 %v837
    %v1252 = vpop.f32.mrf.mxu0
    %v1253 = vadd.f32 %v1240, %v1252
    %v1254 = vpop.f32.mrf.mxu0
    %1255 = vdwg.mxu0
    %1256 = vmatpush.bf16.msra.mxu0 %v1148
    %1257 = vmatpush.bf16.msra.mxu0 %v1146
    %1258 = vmatpush.bf16.msra.mxu0 %v1144
    %1259 = vmatpush.bf16.msra.mxu0 %v1142
    %1260 = vmatpush.bf16.msra.mxu0 %v1140
    %1261 = vmatpush.bf16.msra.mxu0 %v1138
    %1262 = vmatpush.bf16.msra.mxu0 %v1136
    %1263 = vmatpush.bf16.msra.mxu0 %v1134
    %1264 = vmatmul.bf16.gmra.mxu0 %v838
    %v1265 = vpop.f32.mrf.mxu0
    %v1266 = vadd.f32 %v1253, %v1265
    %v1267 = vpop.f32.mrf.mxu0
    %1268 = vdwg.mxu0
    %1269 = vmatpush.bf16.msra.mxu0 %v1164
    %1270 = vmatpush.bf16.msra.mxu0 %v1162
    %1271 = vmatpush.bf16.msra.mxu0 %v1160
    %1272 = vmatpush.bf16.msra.mxu0 %v1158
    %1273 = vmatpush.bf16.msra.mxu0 %v1156
    %1274 = vmatpush.bf16.msra.mxu0 %v1154
    %1275 = vmatpush.bf16.msra.mxu0 %v1152
    %1276 = vmatpush.bf16.msra.mxu0 %v1150
    %1277 = vmatmul.bf16.gmra.mxu0 %v839
    %v1278 = vpop.f32.mrf.mxu0
    %v1279 = vadd.f32 %v1266, %v1278
    %v1280 = vpop.f32.mrf.mxu0
    %1281 = vdwg.mxu0
    %1282 = vmatpush.bf16.msra.mxu0 %v1117
    %1283 = vmatpush.bf16.msra.mxu0 %v1115
    %1284 = vmatpush.bf16.msra.mxu0 %v1113
    %1285 = vmatpush.bf16.msra.mxu0 %v1111
    %1286 = vmatpush.bf16.msra.mxu0 %v1109
    %1287 = vmatpush.bf16.msra.mxu0 %v1107
    %1288 = vmatpush.bf16.msra.mxu0 %v1105
    %1289 = vmatpush.bf16.msra.mxu0 %v1103
    %1290 = vmatmul.bf16.gmra.mxu0 %v836
    %v1291 = vpop.f32.mrf.mxu0
    %v1292 = vadd.f32 %v907, %v1291
    %v1293 = vpop.f32.mrf.mxu0
    %1294 = vdwg.mxu0
    %1295 = vmatpush.bf16.msra.mxu0 %v1133
    %1296 = vmatpush.bf16.msra.mxu0 %v1131
    %1297 = vmatpush.bf16.msra.mxu0 %v1129
    %1298 = vmatpush.bf16.msra.mxu0 %v1127
    %1299 = vmatpush.bf16.msra.mxu0 %v1125
    %1300 = vmatpush.bf16.msra.mxu0 %v1123
    %1301 = vmatpush.bf16.msra.mxu0 %v1121
    %1302 = vmatpush.bf16.msra.mxu0 %v1119
    %1303 = vmatmul.bf16.gmra.mxu0 %v837
    %v1304 = vpop.f32.mrf.mxu0
    %v1305 = vadd.f32 %v1292, %v1304
    %v1306 = vpop.f32.mrf.mxu0
    %1307 = vdwg.mxu0
    %1308 = vmatpush.bf16.msra.mxu0 %v1149
    %1309 = vmatpush.bf16.msra.mxu0 %v1147
    %1310 = vmatpush.bf16.msra.mxu0 %v1145
    %1311 = vmatpush.bf16.msra.mxu0 %v1143
    %1312 = vmatpush.bf16.msra.mxu0 %v1141
    %1313 = vmatpush.bf16.msra.mxu0 %v1139
    %1314 = vmatpush.bf16.msra.mxu0 %v1137
    %1315 = vmatpush.bf16.msra.mxu0 %v1135
    %1316 = vmatmul.bf16.gmra.mxu0 %v838
    %v1317 = vpop.f32.mrf.mxu0
    %v1318 = vadd.f32 %v1305, %v1317
    %v1319 = vpop.f32.mrf.mxu0
    %1320 = vdwg.mxu0
    %1321 = vmatpush.bf16.msra.mxu0 %v1165
    %1322 = vmatpush.bf16.msra.mxu0 %v1163
    %1323 = vmatpush.bf16.msra.mxu0 %v1161
    %1324 = vmatpush.bf16.msra.mxu0 %v1159
    %1325 = vmatpush.bf16.msra.mxu0 %v1157
    %1326 = vmatpush.bf16.msra.mxu0 %v1155
    %1327 = vmatpush.bf16.msra.mxu0 %v1153
    %1328 = vmatpush.bf16.msra.mxu0 %v1151
    %1329 = vmatmul.bf16.gmra.mxu0 %v839
    %v1330 = vpop.f32.mrf.mxu0
    %v1331 = vadd.f32 %v1318, %v1330
    %v1332 = vpop.f32.mrf.mxu0
    %1333 = vdwg.mxu0
    %v1334 = vmax.f32 %v1279, 0.0
    %v1335 = vmax.f32 %v1331, 0.0
    %v1336 = vpack.c.bf16 %v1334, %v1334
    %v1337 = vpack.c.bf16 %v1335, %v1335
    %v1338 = vld [vmem:[#allocation13] sm:$0xf]
    %v1339 = vld [vmem:[#allocation13 + $0x4] sm:$0xf]
    %v1340 = vld [vmem:[#allocation13 + $0x8] sm:$0xf]
    %v1341 = vld [vmem:[#allocation13 + $0xc] sm:$0xf]
    %v1342 = vld [vmem:[#allocation13 + $0x10] sm:$0xf]
    %v1343 = vld [vmem:[#allocation13 + $0x14] sm:$0xf]
    %v1344 = vld [vmem:[#allocation13 + $0x18] sm:$0xf]
    %v1345 = vld [vmem:[#allocation13 + $0x1c] sm:$0xf]
    %v1346 = vld [vmem:[#allocation13 + $0x20] sm:$0xf]
    %v1347 = vld [vmem:[#allocation13 + $0x24] sm:$0xf]
    %v1348 = vld [vmem:[#allocation13 + $0x28] sm:$0xf]
    %v1349 = vld [vmem:[#allocation13 + $0x2c] sm:$0xf]
    %v1350 = vld [vmem:[#allocation13 + $0x30] sm:$0xf]
    %v1351 = vld [vmem:[#allocation13 + $0x34] sm:$0xf]
    %v1352 = vld [vmem:[#allocation13 + $0x38] sm:$0xf]
    %v1353 = vld [vmem:[#allocation13 + $0x3c] sm:$0xf]
    %v1354 = vld [vmem:[#allocation13 + $0x40] sm:$0xf]
    %v1355 = vld [vmem:[#allocation13 + $0x44] sm:$0xf]
    %v1356 = vld [vmem:[#allocation13 + $0x48] sm:$0xf]
    %v1357 = vld [vmem:[#allocation13 + $0x4c] sm:$0xf]
    %v1358 = vld [vmem:[#allocation13 + $0x50] sm:$0xf]
    %v1359 = vld [vmem:[#allocation13 + $0x54] sm:$0xf]
    %v1360 = vld [vmem:[#allocation13 + $0x58] sm:$0xf]
    %v1361 = vld [vmem:[#allocation13 + $0x5c] sm:$0xf]
    %v1362 = vld [vmem:[#allocation13 + $0x60] sm:$0xf]
    %v1363 = vld [vmem:[#allocation13 + $0x64] sm:$0xf]
    %v1364 = vld [vmem:[#allocation13 + $0x68] sm:$0xf]
    %v1365 = vld [vmem:[#allocation13 + $0x6c] sm:$0xf]
    %v1366 = vld [vmem:[#allocation13 + $0x70] sm:$0xf]
    %v1367 = vld [vmem:[#allocation13 + $0x74] sm:$0xf]
    %v1368 = vld [vmem:[#allocation13 + $0x78] sm:$0xf]
    %v1369 = vld [vmem:[#allocation13 + $0x7c] sm:$0xf]
    %v1370 = vld [vmem:[%s12] sm:$0x1]
    %v1372 = vperm.slane %v1370, 0
    %v1406 = vunpack.c.l.b16 %v1338
    %v1407 = vunpack.c.l.b16 %v1339
    %v1408 = vunpack.c.l.b16 %v1340
    %v1409 = vunpack.c.l.b16 %v1341
    %v1410 = vunpack.c.l.b16 %v1342
    %v1411 = vunpack.c.l.b16 %v1343
    %v1412 = vunpack.c.l.b16 %v1344
    %v1413 = vunpack.c.l.b16 %v1345
    %v1414 = vunpack.c.l.b16 %v1346
    %v1415 = vunpack.c.l.b16 %v1347
    %v1416 = vunpack.c.l.b16 %v1348
    %v1417 = vunpack.c.l.b16 %v1349
    %v1418 = vunpack.c.l.b16 %v1350
    %v1419 = vunpack.c.l.b16 %v1351
    %v1420 = vunpack.c.l.b16 %v1352
    %v1421 = vunpack.c.l.b16 %v1353
    %v1422 = vunpack.c.l.b16 %v1354
    %v1423 = vunpack.c.l.b16 %v1355
    %v1424 = vunpack.c.l.b16 %v1356
    %v1425 = vunpack.c.l.b16 %v1357
    %v1426 = vunpack.c.l.b16 %v1358
    %v1427 = vunpack.c.l.b16 %v1359
    %v1428 = vunpack.c.l.b16 %v1360
    %v1429 = vunpack.c.l.b16 %v1361
    %v1430 = vunpack.c.l.b16 %v1362
    %v1431 = vunpack.c.l.b16 %v1363
    %v1432 = vunpack.c.l.b16 %v1364
    %v1433 = vunpack.c.l.b16 %v1365
    %v1434 = vunpack.c.l.b16 %v1366
    %v1435 = vunpack.c.l.b16 %v1367
    %v1436 = vunpack.c.l.b16 %v1368
    %v1437 = vunpack.c.l.b16 %v1369
    %v1438 = vpack.c.b16 %v1407, %v1406
    %v1439 = vpack.c.b16 %v1409, %v1408
    %v1440 = vpack.c.b16 %v1411, %v1410
    %v1441 = vpack.c.b16 %v1413, %v1412
    %v1442 = vpack.c.b16 %v1415, %v1414
    %v1443 = vpack.c.b16 %v1417, %v1416
    %v1444 = vpack.c.b16 %v1419, %v1418
    %v1445 = vpack.c.b16 %v1421, %v1420
    %v1446 = vpack.c.b16 %v1423, %v1422
    %v1447 = vpack.c.b16 %v1425, %v1424
    %v1448 = vpack.c.b16 %v1427, %v1426
    %v1449 = vpack.c.b16 %v1429, %v1428
    %v1450 = vpack.c.b16 %v1431, %v1430
    %v1451 = vpack.c.b16 %v1433, %v1432
    %v1452 = vpack.c.b16 %v1435, %v1434
    %v1453 = vpack.c.b16 %v1437, %v1436
    %1470 = vmatpush.bf16.msra.mxu0 %v1445
    %1471 = vmatpush.bf16.msra.mxu0 %v1444
    %1472 = vmatpush.bf16.msra.mxu0 %v1443
    %1473 = vmatpush.bf16.msra.mxu0 %v1442
    %1474 = vmatpush.bf16.msra.mxu0 %v1441
    %1475 = vmatpush.bf16.msra.mxu0 %v1440
    %1476 = vmatpush.bf16.msra.mxu0 %v1439
    %1477 = vmatpush.bf16.msra.mxu0 %v1438
    %1478 = vmatmul.bf16.gmra.mxu0 %v1336
    %v1479 = vpop.f32.mrf.mxu0
    %v1480 = vadd.f32 %v1372, %v1479
    %v1481 = vpop.f32.mrf.mxu0
    %1482 = vdwg.mxu0
    %1483 = vmatpush.bf16.msra.mxu0 %v1453
    %1484 = vmatpush.bf16.msra.mxu0 %v1452
    %1485 = vmatpush.bf16.msra.mxu0 %v1451
    %1486 = vmatpush.bf16.msra.mxu0 %v1450
    %1487 = vmatpush.bf16.msra.mxu0 %v1449
    %1488 = vmatpush.bf16.msra.mxu0 %v1448
    %1489 = vmatpush.bf16.msra.mxu0 %v1447
    %1490 = vmatpush.bf16.msra.mxu0 %v1446
    %1491 = vmatmul.bf16.gmra.mxu0 %v1337
    %v1492 = vpop.f32.mrf.mxu0
    %v1493 = vadd.f32 %v1480, %v1492
    %v1494 = vpop.f32.mrf.mxu0
    %1495 = vdwg.mxu0
    %1496 = vst [vmem:[#allocation14] sm:$0xff] %v1493
    // Predicated region
    $region82: #{tpu_custom_call.1} parent=1 // pred_check
      _
    $region83: #{tpu_custom_call.1} parent=1 // pred_check_branch
      %1498 = sbr.rel (0) target = $region85
    $region84: #{tpu_custom_call.1} parent=1 // pred_region
      %1500 = vsyncadd [#allocation4], 0
      %s1502 = sshll.u32 [#allocation14], 4
      %s1503 = int_to_ptr.vmem [resolvable:$true] %s1502
      %s1504 = sshll.u32 %s13, 4
      %s1505 = int_to_ptr.hbm [resolvable:$true] %s1504
      %1507 = dma.vmem_to_hbm [thread:$0]  %s1503, 128, %s1505, [#allocation4]
    $region85: #{tpu_custom_call.1} parent=1 // pred_fallthru
      _
    // Predicated region
    $region86: #{tpu_custom_call.1} parent=1 // pred_check
      _
    $region87: #{tpu_custom_call.1} parent=1 // pred_check_branch
      %1509 = sbr.rel (0) target = $region89
    $region88: #{tpu_custom_call.1} parent=1 // pred_region
      %1511 = dma.done [#allocation4], 128
    $region89: #{tpu_custom_call.1} parent=1 // pred_fallthru
      _
    %1512 = vsyncpa [#allocation3], 1
    %1513 = vsyncpa [#allocation6], 1
    %1514 = vsyncpa [#allocation9], 1
    %1515 = vsyncpa [#allocation12], 1
    %1516 = vsyncpa [#allocation4], 1

</llo_original>
